<compile_context>
chip_gen: v7x
topology: tpu7x:2x2x1
jax: 0.10.0
libtpu: 0.0.40
codegen_flags: <defaults>
</compile_context>

<pallas_src>
import jax
import jax.numpy as jnp
from jax.experimental import pallas as pl
from jax.experimental.pallas import tpu as pltpu


# ---------------------------------------------------------------------------
# "Module" configuration (replaces generate_all_processors / ALL_PROCESSORS)
# ---------------------------------------------------------------------------
ALL_PROCESSORS = ("gain", "distortion", "imager")
FX_NUM_PARAMS = {"gain": 1, "distortion": 1, "imager": 1}
DEFAULT_FX_PROB = {"gain": 0.8, "distortion": 0.5, "imager": 0.7}

FX_INDICES = {name: i for i, name in enumerate(ALL_PROCESSORS)}
PARAM_RANGE = {}
_start = 0
for _name in ALL_PROCESSORS:
    _end = _start + FX_NUM_PARAMS[_name]
    PARAM_RANGE[_name] = (_start, _end)
    _start = _end
TOTAL_NUM_PARAMS = _start            # == 3
NUM_FX = len(ALL_PROCESSORS)

_LN10_OVER_20 = 0.11512925464970229  # ln(10)/20  (dB -> linear via exp)


# ---------------------------------------------------------------------------
# Wrapper-side parameter denormalization (hoisted out of the kernel)
# ---------------------------------------------------------------------------
def _denormalize_params(nn_param):
    """(B, TOTAL_NUM_PARAMS) normalized -> (B, NUM_FX) denormalized scalars."""
    cols = []
    for name in ALL_PROCESSORS:
        s, _ = PARAM_RANGE[name]
        p = nn_param[:, s]
        if name == "gain":
            # dasp_pytorch.Gain: min_gain_db=6.0, max_gain_db=12.0
            cols.append(jnp.exp((6.0 + (12.0 - 6.0) * p) * _LN10_OVER_20))
        elif name == "distortion":
            # Distortion: min_gain_db=0.0, max_gain_db=8.0 (tanh drive)
            cols.append(jnp.exp((0.0 + (8.0 - 0.0) * p) * _LN10_OVER_20))
        elif name == "imager":
            # Imager: min_width=0.0, max_width=1.0
            cols.append(p)
    return jnp.stack(cols, axis=-1).astype(jnp.float32)


# --- per-FX processing on a (1, C, s_tile, 128) f32 value; scalar param -----
def _apply_gain(x, gain_lin):
    return x * gain_lin


def _apply_distortion(x, drive_lin):
    # TODO(synk): dasp Distortion may apply additional output-level compensation.
    return jnp.tanh(x * drive_lin)


def _apply_imager(x, width):
    # TODO(synk): dasp Imager uses an amplitude-preserving pan law; linear law here.
    mid = jnp.mean(x, axis=1, keepdims=True)   # channel axis is an outer dim: VPU add
    return mid + width * (x - mid)             # width=1 -> identity, 0 -> mono


_FX_FNS = {"gain": _apply_gain, "distortion": _apply_distortion,
           "imager": _apply_imager}


# ---------------------------------------------------------------------------
# Pallas kernel (value-level chain: 1 load, 1 store)
# ---------------------------------------------------------------------------
def _make_kernel(processors_order):
    processors_order = tuple(processors_order)
    for name in processors_order:
        if name not in _FX_FNS:
            raise NotImplementedError(
                f"FX '{name}' has no Pallas implementation "
                "(eq/multiband_comp/limiter/delay/reverb are untranslatable here)")

    def kernel(fxp_ref, act_ref, x_ref, o_ref):
        # fxp_ref: (B*NUM_FX,) f32 SMEM -- denormalized per-FX scalar params
        # act_ref: (B*NUM_FX,) f32 SMEM -- 0/1 activation mask
        # x_ref / o_ref: (1, C, s_tile, 128) VMEM tiles
        b = pl.program_id(0)
        x = x_ref[...].astype(jnp.float32)

        for fx_name in processors_order:
            idx = FX_INDICES[fx_name]
            flat = b * NUM_FX + idx
            active = act_ref[flat] != 0.0
            p = fxp_ref[flat]

            # Compute unconditionally (EUP/VPU slots are idle in this
            # HBM-bound kernel) and blend with a scalar-predicate select.
            x_proc = _FX_FNS[fx_name](x, p)
            # Faithful `~mask.int()` blend:
            #   active   (m=1): x_proc - 2*x
            #   inactive (m=0): -x
            x = jnp.where(active, x_proc - 2.0 * x, -x)

            # TODO(synk): the global `torch.isnan(x_processed).any() -> break`
            # early exit is a data-dependent whole-batch branch and is not
            # reproduced inside the tiled kernel.

        o_ref[...] = x.astype(o_ref.dtype)

    return kernel


# ---------------------------------------------------------------------------
# Generation-aware sizing helpers
# ---------------------------------------------------------------------------
def _tpu_vmem_capacity_bytes():
    try:
        return int(pltpu.get_tpu_info().vmem_capacity_bytes)
    except Exception:
        return 64 * 1024 * 1024            # conservative (v7x-sized) fallback


def _derive_budgets(max_block_bytes):
    vmem_cap = _tpu_vmem_capacity_bytes()
    if vmem_cap >= 100 * 1024 * 1024:      # v5e / v6e: 128 MiB VMEM
        block = 8 * 1024 * 1024
        vmem_limit = 64 * 1024 * 1024
    else:                                  # v7x (64 MiB) or unknown
        block = 4 * 1024 * 1024
        vmem_limit = 32 * 1024 * 1024
    if max_block_bytes is not None:
        block = int(max_block_bytes)
    return block, vmem_limit


# ---------------------------------------------------------------------------
# Wrapper == Random_FX_Chain.forward
# ---------------------------------------------------------------------------
def random_fx_chain_forward(x, nn_param=None, activate=None,
                            processors_order=ALL_PROCESSORS,
                            *, key=None, max_block_bytes=None):
    B, C, T = x.shape
    assert T % 128 == 0, "time length must be a multiple of 128 (lane width)"
    S = T // 128

    if key is None:
        key = jax.random.PRNGKey(0)
    kp, ka = jax.random.split(key)

    if nn_param is None:                       # torch.rand((B, total_num_param))
        nn_param = jax.random.uniform(kp, (B, TOTAL_NUM_PARAMS), dtype=jnp.float32)
    else:
        assert nn_param.shape == (B, TOTAL_NUM_PARAMS)
    nn_param = nn_param.astype(jnp.float32)

    if activate is None:                       # torch.bernoulli(fx_prob expanded)
        fx_prob = jnp.array([DEFAULT_FX_PROB[n] for n in ALL_PROCESSORS],
                            dtype=jnp.float32)
        activate = jax.random.bernoulli(ka, fx_prob, shape=(B, NUM_FX))
    activate = activate.astype(jnp.float32)

    # Hoisted denormalization: scalar exp/dB math runs once per batch in XLA.
    fx_scal = _denormalize_params(nn_param)            # (B, NUM_FX) f32
    fx_scal_flat = fx_scal.reshape(-1)                  # 1D SMEM (cheap padding)
    activate_flat = activate.reshape(-1)

    # ---- layout + tiling (no wrapper-side pad/slice) ------------------------
    block_bytes, vmem_limit = _derive_budgets(max_block_bytes)
    itemsize = jnp.dtype(x.dtype).itemsize
    row_bytes = C * 128 * itemsize                       # one sublane-row, all channels
    max_rows = max(8, block_bytes // row_bytes)

    if S <= max_rows:
        s_tile = S                                       # whole time axis in one block
    else:
        s_tile = (max_rows // 8) * 8                     # multiple of 8 sublanes
    n_blocks = pl.cdiv(S, s_tile)

    # v7x megacore balance: prefer an even, >=2 total step count when cheap.
    total_steps = B * n_blocks
    if (total_steps < 2 or (total_steps % 2 == 1 and total_steps < 16)) and s_tile > 8:
        new_tile = max(8, ((s_tile // 2 + 7) // 8) * 8)
        if new_tile < s_tile:
            s_tile = new_tile
            n_blocks = pl.cdiv(S, s_tile)

    xr = x.reshape(B, C, S, 128)
    kernel = _make_kernel(processors_order)
    grid = (B, n_blocks)

    io_bytes = 2 * B * C * S * 128 * itemsize
    transcendentals = B * C * T if "distortion" in processors_order else 0
    cost = pl.CostEstimate(flops=12 * B * C * T,
                           transcendentals=transcendentals,
                           bytes_accessed=io_bytes)

    out = pl.pallas_call(
        kernel,
        out_shape=jax.ShapeDtypeStruct((B, C, S, 128), x.dtype),
        grid_spec=pltpu.PrefetchScalarGridSpec(
            num_scalar_prefetch=0,
            grid=grid,
            in_specs=[
                pl.BlockSpec(memory_space=pltpu.MemorySpace.SMEM),   # fx_scal (1D)
                pl.BlockSpec(memory_space=pltpu.MemorySpace.SMEM),   # activate (1D)
                pl.BlockSpec((1, C, s_tile, 128), lambda b, s: (b, 0, s, 0)),
            ],
            out_specs=pl.BlockSpec((1, C, s_tile, 128), lambda b, s: (b, 0, s, 0)),
        ),
        compiler_params=pltpu.CompilerParams(
            dimension_semantics=("parallel", "parallel"),
            vmem_limit_bytes=vmem_limit),
        cost_estimate=cost,
    )(fx_scal_flat, activate_flat, xr)

    return out.reshape(B, C, T), nn_param, activate


# ---------------------------------------------------------------------------
# Pure-JAX reference (for correctness check)
# ---------------------------------------------------------------------------
def _reference_forward(x, nn_param, activate, processors_order):
    x = x.astype(jnp.float32)
    fx_scal = _denormalize_params(nn_param)
    for name in processors_order:
        idx = FX_INDICES[name]
        p = fx_scal[:, idx][:, None, None]
        if name == "gain":
            xp = x * p
        elif name == "distortion":
            xp = jnp.tanh(x * p)
        elif name == "imager":
            mid = jnp.mean(x, axis=1, keepdims=True)
            xp = mid + p * (x - mid)
        m = activate[:, idx].astype(jnp.int32)[:, None, None]
        x = xp * m + x * (~m)      # faithful `~mask.int()` bitwise-NOT blend
    return x


if __name__ == "__main__":
    key = jax.random.PRNGKey(0)
    kx, kfwd = jax.random.split(key)

    B, C, T = 2, 2, 512                        # small stereo audio batch
    x = jax.random.normal(kx, (B, C, T), dtype=jnp.float32) * 0.1

    order = ("gain", "distortion", "imager")
    y, nn_param, activate = random_fx_chain_forward(x, processors_order=order,
                                                    key=kfwd)
    jax.block_until_ready(y)

    assert y.shape == x.shape
    assert nn_param.shape == (B, TOTAL_NUM_PARAMS)
    assert activate.shape == (B, NUM_FX)

    y_ref = _reference_forward(x, nn_param, activate, order)
    max_err = float(jnp.max(jnp.abs(y.astype(jnp.float32) - y_ref)))
    assert max_err < 1e-4, f"mismatch vs reference: {max_err}"
    print("KERNEL_OK")
</pallas_src>

<mosaic_0001>
module attributes {stable_mosaic.version = 11 : i64} {
  func.func @kernel(%arg0: i32, %arg1: i32, %arg2: memref<6xf32, #tpu.memory_space<smem>>, %arg3: memref<6xf32, #tpu.memory_space<smem>>, %arg4: memref<1x2x4x128xf32, #tpu.memory_space<vmem>>, %arg5: memref<1x2x4x128xf32, #tpu.memory_space<vmem>>) attributes {dimension_semantics = [#tpu.dimension_semantics<parallel>, #tpu.dimension_semantics<parallel>], iteration_bounds = array<i64: 2, 1>, scalar_prefetch = 0 : i64, scratch_operands = 0 : i64, tpu.core_type = #tpu.core_type<tc>, window_params = [{transform_indices = @transform_0, window_bounds = array<i64: 6>}, {transform_indices = @transform_1, window_bounds = array<i64: 6>}, {transform_indices = @transform_2, window_bounds = array<i64: 1, 2, 4, 128>}, {transform_indices = @transform_3, window_bounds = array<i64: 1, 2, 4, 128>}]} {
    %c0 = arith.constant 0 : index
    %c0_0 = arith.constant 0 : index
    %c0_1 = arith.constant 0 : index
    %c0_2 = arith.constant 0 : index
    %0 = vector.load %arg4[%c0, %c0_0, %c0_1, %c0_2] : memref<1x2x4x128xf32, #tpu.memory_space<vmem>>, vector<1x2x4x128xf32>
    %c3_i32 = arith.constant 3 : i32
    %1 = arith.muli %arg0, %c3_i32 : i32
    %c0_i32 = arith.constant 0 : i32
    %2 = arith.addi %1, %c0_i32 : i32
    %3 = arith.index_cast %2 : i32 to index
    %4 = memref.load %arg3[%3] : memref<6xf32, #tpu.memory_space<smem>>
    %cst = arith.constant 0.000000e+00 : f32
    %5 = arith.cmpf one, %4, %cst : f32
    %6 = arith.index_cast %2 : i32 to index
    %7 = memref.load %arg2[%6] : memref<6xf32, #tpu.memory_space<smem>>
    %8 = vector.broadcast %7 : f32 to vector<1x2x4x128xf32>
    %9 = arith.mulf %0, %8 : vector<1x2x4x128xf32>
    %cst_3 = arith.constant 2.000000e+00 : f32
    %10 = vector.broadcast %cst_3 : f32 to vector<1x2x4x128xf32>
    %11 = arith.mulf %10, %0 : vector<1x2x4x128xf32>
    %12 = arith.subf %9, %11 : vector<1x2x4x128xf32>
    %cst_4 = arith.constant 0.000000e+00 : f32
    %13 = vector.broadcast %cst_4 : f32 to vector<1x2x4x128xf32>
    %14 = arith.subf %13, %0 : vector<1x2x4x128xf32>
    %15 = arith.select %5, %12, %14 : vector<1x2x4x128xf32>
    %c3_i32_5 = arith.constant 3 : i32
    %16 = arith.muli %arg0, %c3_i32_5 : i32
    %c1_i32 = arith.constant 1 : i32
    %17 = arith.addi %16, %c1_i32 : i32
    %18 = arith.index_cast %17 : i32 to index
    %19 = memref.load %arg3[%18] : memref<6xf32, #tpu.memory_space<smem>>
    %cst_6 = arith.constant 0.000000e+00 : f32
    %20 = arith.cmpf one, %19, %cst_6 : f32
    %21 = arith.index_cast %17 : i32 to index
    %22 = memref.load %arg2[%21] : memref<6xf32, #tpu.memory_space<smem>>
    %23 = vector.broadcast %22 : f32 to vector<1x2x4x128xf32>
    %24 = arith.mulf %15, %23 : vector<1x2x4x128xf32>
    %25 = math.tanh %24 : vector<1x2x4x128xf32>
    %cst_7 = arith.constant 2.000000e+00 : f32
    %26 = vector.broadcast %cst_7 : f32 to vector<1x2x4x128xf32>
    %27 = arith.mulf %26, %15 : vector<1x2x4x128xf32>
    %28 = arith.subf %25, %27 : vector<1x2x4x128xf32>
    %cst_8 = arith.constant 0.000000e+00 : f32
    %29 = vector.broadcast %cst_8 : f32 to vector<1x2x4x128xf32>
    %30 = arith.subf %29, %15 : vector<1x2x4x128xf32>
    %31 = arith.select %20, %28, %30 : vector<1x2x4x128xf32>
    %c3_i32_9 = arith.constant 3 : i32
    %32 = arith.muli %arg0, %c3_i32_9 : i32
    %c2_i32 = arith.constant 2 : i32
    %33 = arith.addi %32, %c2_i32 : i32
    %34 = arith.index_cast %33 : i32 to index
    %35 = memref.load %arg3[%34] : memref<6xf32, #tpu.memory_space<smem>>
    %cst_10 = arith.constant 0.000000e+00 : f32
    %36 = arith.cmpf one, %35, %cst_10 : f32
    %37 = arith.index_cast %33 : i32 to index
    %38 = memref.load %arg2[%37] : memref<6xf32, #tpu.memory_space<smem>>
    %cst_11 = arith.constant dense<0.000000e+00> : vector<1x4x128xf32>
    %39 = vector.multi_reduction <add>, %31, %cst_11 [1] : vector<1x2x4x128xf32> to vector<1x4x128xf32>
    %40 = vector.shape_cast %39 : vector<1x4x128xf32> to vector<1x1x4x128xf32>
    %cst_12 = arith.constant 2.000000e+00 : f32
    %41 = vector.broadcast %cst_12 : f32 to vector<1x1x4x128xf32>
    %42 = arith.divf %40, %41 : vector<1x1x4x128xf32>
    %43 = vector.broadcast %42 : vector<1x1x4x128xf32> to vector<1x2x4x128xf32>
    %44 = arith.subf %31, %43 : vector<1x2x4x128xf32>
    %45 = vector.broadcast %38 : f32 to vector<1x2x4x128xf32>
    %46 = arith.mulf %45, %44 : vector<1x2x4x128xf32>
    %47 = vector.broadcast %42 : vector<1x1x4x128xf32> to vector<1x2x4x128xf32>
    %48 = arith.addf %47, %46 : vector<1x2x4x128xf32>
    %cst_13 = arith.constant 2.000000e+00 : f32
    %49 = vector.broadcast %cst_13 : f32 to vector<1x2x4x128xf32>
    %50 = arith.mulf %49, %31 : vector<1x2x4x128xf32>
    %51 = arith.subf %48, %50 : vector<1x2x4x128xf32>
    %cst_14 = arith.constant 0.000000e+00 : f32
    %52 = vector.broadcast %cst_14 : f32 to vector<1x2x4x128xf32>
    %53 = arith.subf %52, %31 : vector<1x2x4x128xf32>
    %54 = arith.select %36, %51, %53 : vector<1x2x4x128xf32>
    %c0_15 = arith.constant 0 : index
    %c0_16 = arith.constant 0 : index
    %c0_17 = arith.constant 0 : index
    %c0_18 = arith.constant 0 : index
    %55 = vector.load %arg5[%c0_15, %c0_16, %c0_17, %c0_18] : memref<1x2x4x128xf32, #tpu.memory_space<vmem>>, vector<1x2x4x128xf32>
    tpu.vector_store %arg5[%c0_15, %c0_16, %c0_17, %c0_18], %54 {strides = array<i32>} : memref<1x2x4x128xf32, #tpu.memory_space<vmem>>, vector<1x2x4x128xf32>,
    return
  }
  func.func @transform_0(%arg0: i32, %arg1: i32) -> i32 {
    %c0_i32 = arith.constant 0 : i32
    %c0_i32_0 = arith.constant 0 : i32
    return %c0_i32 : i32
  }
  func.func @transform_1(%arg0: i32, %arg1: i32) -> i32 {
    %c0_i32 = arith.constant 0 : i32
    %c0_i32_0 = arith.constant 0 : i32
    return %c0_i32 : i32
  }
  func.func @transform_2(%arg0: i32, %arg1: i32) -> (i32, i32, i32, i32) {
    %c0_i32 = arith.constant 0 : i32
    %c0_i32_0 = arith.constant 0 : i32
    %c0_i32_1 = arith.constant 0 : i32
    return %arg0, %c0_i32, %arg1, %c0_i32_0 : i32, i32, i32, i32
  }
  func.func @transform_3(%arg0: i32, %arg1: i32) -> (i32, i32, i32, i32) {
    %c0_i32 = arith.constant 0 : i32
    %c0_i32_0 = arith.constant 0 : i32
    %c0_i32_1 = arith.constant 0 : i32
    return %arg0, %c0_i32, %arg1, %c0_i32_0 : i32, i32, i32, i32
  }
}

</mosaic_0001>

<llo_original>
// kernel: tpu_custom_call.1
$region0: #{tpu_custom_call.1}
  #allocation0 [shape = 'u32[]', space=smem, size = 0x4, offset = 0x4, fixed_abs, tag = 'smem constant byte address 0x4 - core index']
  #allocation1 [shape = 'u32[144,128]{1,0:T(1,128)}', space=vmem, size = 0x12000, scoped, tag = 'internal scratch']
  %s0 = inlined_call_operand.hbm [shape: f32[6], index: 0, kind: input, shape index: {}]
  %s1 = inlined_call_operand.vmem [shape: f32[6], index: 1, kind: input, shape index: {}]
  %s2 = inlined_call_operand.hbm [shape: f32[2,2,4,128], index: 2, kind: input, shape index: {}]
  %s3 = inlined_call_operand.hbm [shape: f32[2,2,4,128], index: 3, kind: output, shape index: {}]
  %s4 = sld [smem:[#allocation0]]
  $region57: #{tpu_custom_call.1} parent=0
    _
  %s6 = ssub.s32 1, %s4
  %s7 = scalar_select 0, %s6, %s4
  $region1: #{tpu_custom_call.1} parent=0
    #allocation2 [shape = 'u8[512]{0}', space=smem, size = 0x200, scoped, tag = 'input window, operand 0, single buffered']
    #allocation3 [shape = 's32[2]{0}', space=sflag, size = 0x8, scoped, tag = 'scoped memory for tpu_custom_call.1']
    #allocation4 [shape = 's32[2]{0}', space=sflag, size = 0x8, scoped, tag = 'scoped memory for tpu_custom_call.1']
    #allocation5 [shape = 's32[2]{0}', space=sflag, size = 0x8, scoped, tag = 'scoped memory for tpu_custom_call.1']
    #allocation6 [shape = 's32[2]{0}', space=sflag, size = 0x8, scoped, tag = 'scoped memory for tpu_custom_call.1']
    #allocation7 [shape = 'u8[512]{0}', space=smem, size = 0x200, scoped, tag = 'input window, operand 1, single buffered']
    #allocation8 [shape = 'u8[8192]{0}', space=vmem, size = 0x2000, scoped, tag = 'input window, operand 2']
    #allocation9 [shape = 'u8[8192]{0}', space=vmem, size = 0x2000, scoped, tag = 'output window, operand 0']
    %8 = vsyncpa [#allocation5], 0
    %9 = vsyncpa [#allocation6], 0
    %10 = vsyncpa [#allocation3], 0
    %s11 = scalar_lea.sflag [#allocation3], 1
    %12 = vsyncpa %s11, 0
    %13 = vsyncpa [#allocation4], 0
    %s14 = scalar_lea.sflag [#allocation4], 1
    %15 = vsyncpa %s14, 0
    loop: start=0, step=1, limit=4
    $region2: #{tpu_custom_call.1} parent=1 // loop_pre_header
      _
    $region3: #{tpu_custom_call.1} parent=1 // loop_header
      %s17 = sphi 0, %s21
      %p18 = scmp.ge.s32.totalorder %s17, 4
      %s24 = sphi 0, %s36
      %s25 = sphi 0, %s32
      %s26 = sphi 0, %s24
      %s27 = sphi 0, %s25
      %s28 = sphi 0, %s26
      %s29 = sphi 0, %s27
      %s37 = sphi 0, %s37
      %s39 = sphi 0, %s37
      %s40 = sphi 0, %s39
      %s54 = sphi 0, %s40
      %s58 = sphi 0, %s58
      %s60 = sphi 0, %s58
      %s61 = sphi 0, %s60
      %s75 = sphi 0, %s61
      %s83 = sphi 0, %s85
      %s86 = sphi 0, %s83
      %s87 = sphi 0, %s86
      %s103 = sphi 0, %s87
      %s111 = sphi 0, %s113
      %s114 = sphi 0, %s111
      %s115 = sphi 0, %s114
      %s131 = sphi 0, %s115
    $region4: #{tpu_custom_call.1} parent=1 // loop_header_branch
      %20 = sbr.rel (%p18) target = $region8
    $region5: #{tpu_custom_call.1} parent=1 // loop_body
      %s22 = ssub.s32 %s17, 1
      %s23 = ssub.s32 %s17, 2
      %s30 = sadd.s32 1, %s25
      %p31 = scmp.ge.s32.totalorder %s30, 1
      %s32 = scalar_select %p31, 0, %s30
      %s33 = sadd.s32 1, %s24
      %s34 = scalar_select %p31, %s33, %s24
      %p35 = scmp.ge.s32.totalorder %s34, 2
      %s36 = scalar_select %p35, 0, %s34
      %s38 = sadd.s32 %s37, 1
      %p41 = scmp.eq.s32.totalorder %s17, 1
      %p42 = scmp.ne.s32.totalorder %s37, %s39
      %p43 = scmp.eq.s32.totalorder %s17, 0
      %p44 = por %p42, %p43
      %p45 = scmp.ne.s32.totalorder %s37, %s39
      %p46 = scmp.eq.s32.totalorder %s22, 1
      %p47 = por %p45, %p46
      %p48 = scmp.ne.s32.totalorder %s39, %s40
      %p49 = scmp.eq.s32.totalorder %s22, 0
      %p50 = por %p48, %p49
      %p51 = scmp.ne.s32.totalorder %s39, %s40
      %p52 = scmp.eq.s32.totalorder %s23, 1
      %p53 = por %p51, %p52
      %p55 = scmp.ne.s32.totalorder %s40, %s54
      %p56 = scmp.eq.s32.totalorder %s23, 0
      %p57 = por %p55, %p56
      %s59 = sadd.s32 %s58, 1
      %p62 = scmp.eq.s32.totalorder %s17, 1
      %p63 = scmp.ne.s32.totalorder %s58, %s60
      %p64 = scmp.eq.s32.totalorder %s17, 0
      %p65 = por %p63, %p64
      %p66 = scmp.ne.s32.totalorder %s58, %s60
      %p67 = scmp.eq.s32.totalorder %s22, 1
      %p68 = por %p66, %p67
      %p69 = scmp.ne.s32.totalorder %s60, %s61
      %p70 = scmp.eq.s32.totalorder %s22, 0
      %p71 = por %p69, %p70
      %p72 = scmp.ne.s32.totalorder %s60, %s61
      %p73 = scmp.eq.s32.totalorder %s23, 1
      %p74 = por %p72, %p73
      %p76 = scmp.ne.s32.totalorder %s61, %s75
      %p77 = scmp.eq.s32.totalorder %s23, 0
      %p78 = por %p76, %p77
      %s79 = ssub.s32 %s24, %s36
      %s80 = ssub.s32 %s25, %s32
      %s81 = sor.u32 %s79, %s80
      %p82 = scmp.eq.s32.totalorder %s81, 0
      %s84 = sadd.s32 %s83, 1
      %s85 = scalar_select %p82, %s83, %s84
      %p88 = pneg %p82
      %p89 = scmp.eq.s32.totalorder %s17, 1
      %p90 = por %p88, %p89
      %p91 = scmp.ne.s32.totalorder %s83, %s86
      %p92 = scmp.eq.s32.totalorder %s17, 0
      %p93 = por %p91, %p92
      %p94 = scmp.ne.s32.totalorder %s83, %s86
      %p95 = scmp.eq.s32.totalorder %s22, 1
      %p96 = por %p94, %p95
      %p97 = scmp.ne.s32.totalorder %s86, %s87
      %p98 = scmp.eq.s32.totalorder %s22, 0
      %p99 = por %p97, %p98
      %p100 = scmp.ne.s32.totalorder %s86, %s87
      %p101 = scmp.eq.s32.totalorder %s23, 1
      %p102 = por %p100, %p101
      %p104 = scmp.ne.s32.totalorder %s87, %s103
      %p105 = scmp.eq.s32.totalorder %s23, 0
      %p106 = por %p104, %p105
      %s107 = ssub.s32 %s24, %s36
      %s108 = ssub.s32 %s25, %s32
      %s109 = sor.u32 %s107, %s108
      %p110 = scmp.eq.s32.totalorder %s109, 0
      %s112 = sadd.s32 %s111, 1
      %s113 = scalar_select %p110, %s111, %s112
      %p116 = pneg %p110
      %p117 = scmp.eq.s32.totalorder %s17, 1
      %p118 = por %p116, %p117
      %p119 = scmp.ne.s32.totalorder %s111, %s114
      %p120 = scmp.eq.s32.totalorder %s17, 0
      %p121 = por %p119, %p120
      %p122 = scmp.ne.s32.totalorder %s111, %s114
      %p123 = scmp.eq.s32.totalorder %s22, 1
      %p124 = por %p122, %p123
      %p125 = scmp.ne.s32.totalorder %s114, %s115
      %p126 = scmp.eq.s32.totalorder %s22, 0
      %p127 = por %p125, %p126
      %p128 = scmp.ne.s32.totalorder %s114, %s115
      %p129 = scmp.eq.s32.totalorder %s23, 1
      %p130 = por %p128, %p129
      %p132 = scmp.ne.s32.totalorder %s115, %s131
      %p133 = scmp.eq.s32.totalorder %s23, 0
      %p134 = por %p132, %p133
      %p135 = scmp.le.s32.totalorder 1, %s17
      %p136 = scmp.lt.s32.totalorder %s17, 3
      %p137 = pnand %p135, %p136
      %p138 = pneg %p137
      // Predicated region
      $region9: #{tpu_custom_call.1} parent=5 // pred_check
        _
      $region10: #{tpu_custom_call.1} parent=5 // pred_check_branch
        %140 = sbr.rel (%p137) target = $region12
      $region11: #{tpu_custom_call.1} parent=5 // pred_region
        %s141 = ssub.s32 %s17, 1
        // Predicated region
        $region13: #{tpu_custom_call.1} parent=11 // pred_check
          %p142 = pneg %p50
        $region14: #{tpu_custom_call.1} parent=11 // pred_check_branch
          %144 = sbr.rel (%p142) target = $region16
        $region15: #{tpu_custom_call.1} parent=11 // pred_region
          %s146 = ssub.s32 16, 16
          %147 = vsyncadd [#allocation5], %s146
          %150 = dma.hbm_to_smem %s0, 16, [#allocation2], [#allocation5]
        $region16: #{tpu_custom_call.1} parent=11 // pred_fallthru
          _
        // Predicated region
        $region17: #{tpu_custom_call.1} parent=11 // pred_check
          %p151 = pneg %p71
        $region18: #{tpu_custom_call.1} parent=11 // pred_check_branch
          %153 = sbr.rel (%p151) target = $region20
        $region19: #{tpu_custom_call.1} parent=11 // pred_region
          %s155 = ssub.s32 16, 16
          %156 = vsyncadd [#allocation6], %s155
          %s158 = sshll.u32 %s1, 4
          %s159 = int_to_ptr.vmem [resolvable:$true] %s158
          %161 = dma.vmem_to_smem %s159, 16, [#allocation7], [#allocation6]
        $region20: #{tpu_custom_call.1} parent=11 // pred_fallthru
          _
      $region12: #{tpu_custom_call.1} parent=5 // pred_fallthru
        _
      %p162 = scmp.lt.s32.totalorder %s17, 2
      // Predicated region
      $region21: #{tpu_custom_call.1} parent=5 // pred_check
        %p163 = pneg %p162
      $region22: #{tpu_custom_call.1} parent=5 // pred_check_branch
        %165 = sbr.rel (%p163) target = $region24
      $region23: #{tpu_custom_call.1} parent=5 // pred_region
        // Predicated region
        $region25: #{tpu_custom_call.1} parent=23 // pred_check
          %p166 = pneg %p93
        $region26: #{tpu_custom_call.1} parent=23 // pred_check_branch
          %168 = sbr.rel (%p166) target = $region28
        $region27: #{tpu_custom_call.1} parent=23 // pred_region
          %s169 = sand.u32 %s83, 1
          %s170 = scalar_lea.sflag [#allocation3], %s169
          %s171 = sand.u32 %s83, 1
          %s172 = smul.addr %s171, 8
          %s173 = scalar_lea.vmem [#allocation8], %s172
          %s175 = ssub.s32 128, 128
          %176 = vsyncadd %s170, %s175
          %s177 = smul.addr %s24, 2
          %s178 = sadd.s32 %s25, %s177
          %s179 = smul.addr %s178, 64
          %s180 = scalar_lea.hbm %s2, %s179
          %s181 = sshll.u32 %s173, 4
          %s182 = int_to_ptr.vmem [resolvable:$true] %s181
          %187 = dma.hbm_to_vmem [thread:$0]  %s180, 128, %s182, %s170, 64, 64, 4
        $region28: #{tpu_custom_call.1} parent=23 // pred_fallthru
          _
      $region24: #{tpu_custom_call.1} parent=5 // pred_fallthru
        _
      %p188 = scmp.le.s32.totalorder 1, %s17
      %p189 = scmp.lt.s32.totalorder %s17, 3
      %p190 = pnand %p188, %p189
      %p191 = pneg %p190
      // Predicated region
      $region29: #{tpu_custom_call.1} parent=5 // pred_check
        _
      $region30: #{tpu_custom_call.1} parent=5 // pred_check_branch
        %193 = sbr.rel (%p190) target = $region32
      $region31: #{tpu_custom_call.1} parent=5 // pred_region
        %s194 = ssub.s32 %s17, 1
        // Predicated region
        $region33: #{tpu_custom_call.1} parent=31 // pred_check
          %p195 = pneg %p50
        $region34: #{tpu_custom_call.1} parent=31 // pred_check_branch
          %197 = sbr.rel (%p195) target = $region36
        $region35: #{tpu_custom_call.1} parent=31 // pred_region
          %198 = dma.done [#allocation5], 16
        $region36: #{tpu_custom_call.1} parent=31 // pred_fallthru
          _
        // Predicated region
        $region37: #{tpu_custom_call.1} parent=31 // pred_check
          %p199 = pneg %p71
        $region38: #{tpu_custom_call.1} parent=31 // pred_check_branch
          %201 = sbr.rel (%p199) target = $region40
        $region39: #{tpu_custom_call.1} parent=31 // pred_region
          %202 = dma.done [#allocation6], 16
        $region40: #{tpu_custom_call.1} parent=31 // pred_fallthru
          _
        %s203 = sand.u32 %s86, 1
        %s204 = scalar_lea.sflag [#allocation3], %s203
        %s205 = sand.u32 %s86, 1
        %s206 = smul.addr %s205, 8
        %s207 = scalar_lea.vmem [#allocation8], %s206
        // Predicated region
        $region41: #{tpu_custom_call.1} parent=31 // pred_check
          %p208 = pneg %p99
        $region42: #{tpu_custom_call.1} parent=31 // pred_check_branch
          %210 = sbr.rel (%p208) target = $region44
        $region43: #{tpu_custom_call.1} parent=31 // pred_region
          %211 = dma.done %s204, 128
        $region44: #{tpu_custom_call.1} parent=31 // pred_fallthru
          _
        %212 = sfence
        %p213 = pneg %p50
        %p214 = pneg %p47
        %p215 = pneg %p71
        %p216 = pneg %p68
        %s217 = sand.u32 %s86, 1
        %s218 = scalar_lea.sflag [#allocation3], %s217
        %s219 = sand.u32 %s86, 1
        %s220 = smul.addr %s219, 8
        %s221 = scalar_lea.vmem [#allocation8], %s220
        %p222 = pneg %p99
        %p223 = pneg %p96
        %p224 = pneg %p127
        %p225 = pneg %p124
        %s226 = sand.u32 %s114, 1
        %s227 = scalar_lea.sflag [#allocation4], %s226
        %s228 = sand.u32 %s114, 1
        %s229 = smul.addr %s228, 8
        %s230 = scalar_lea.vmem [#allocation9], %s229
        %v231 = vld [vmem:[%s207] sm:$0xf]
        %v232 = vld [vmem:[%s207 + $0x4] sm:$0xf]
        %s233 = smul.u32 %s26, 3
        %s234 = sld [smem:[#allocation7 + %s233]]
        %p235 = scmp.ne.f32.partialorder %s234, 0.0
        %s236 = sld [smem:[#allocation2 + %s233]]
        %v237 = vstv %s236
        %v238 = vmul.f32 %v231, %v237
        %v239 = vmul.f32 %v232, %v237
        %v240 = vmul.f32 %v231, 2.0
        %v241 = vmul.f32 %v232, 2.0
        %v242 = vsub.f32 %v238, %v240
        %v243 = vsub.f32 %v239, %v241
        %v244 = vsub.f32 0.0, %v231
        %v245 = vsub.f32 0.0, %v232
        %s246 = scalar_select %p235, 1, 0
        %v247 = vstv %s246
        %vm248 = vcmp.eq.s32.totalorder %v247, 1
        %v249 = vsel %vm248, %v242, %v244
        %v250 = vsel %vm248, %v243, %v245
        %s251 = sadd.s32 %s233, 1
        %s252 = sld [smem:[#allocation7 + %s251]]
        %p253 = scmp.ne.f32.partialorder %s252, 0.0
        %s254 = sld [smem:[#allocation2 + %s251]]
        %v255 = vstv %s254
        %v256 = vmul.f32 %v249, %v255
        %v257 = vmul.f32 %v250, %v255
        %v258 = vtanh.pop %v256
        %v259 = vtanh.pop %v257
        %v260 = vmul.f32 %v249, 2.0
        %v261 = vmul.f32 %v250, 2.0
        %v262 = vsub.f32 %v258, %v260
        %v263 = vsub.f32 %v259, %v261
        %v264 = vsub.f32 0.0, %v249
        %v265 = vsub.f32 0.0, %v250
        %s266 = scalar_select %p253, 1, 0
        %v267 = vstv %s266
        %vm268 = vcmp.eq.s32.totalorder %v267, 1
        %v269 = vsel %vm268, %v262, %v264
        %v270 = vsel %vm268, %v263, %v265
        %s271 = sadd.s32 %s233, 2
        %s272 = sld [smem:[#allocation7 + %s271]]
        %p273 = scmp.ne.f32.partialorder %s272, 0.0
        %s274 = sld [smem:[#allocation2 + %s271]]
        %vm275 = vcmask 1043456
        %v276 = vsel %vm275, %v269, 0.0
        %v277 = vsel %vm275, %v270, 0.0
        %v278 = vadd.f32 %v276, %v277
        %v279 = vrcp.pop 2.0
        %v280 = vmul.f32 %v278, %v279
        %v281 = vsub.f32 %v269, %v280
        %v282 = vsub.f32 %v270, %v280
        %v283 = vstv %s274
        %v284 = vmul.f32 %v283, %v281
        %v285 = vmul.f32 %v283, %v282
        %v286 = vadd.f32 %v280, %v284
        %v287 = vadd.f32 %v280, %v285
        %v288 = vmul.f32 %v269, 2.0
        %v289 = vmul.f32 %v270, 2.0
        %v290 = vsub.f32 %v286, %v288
        %v291 = vsub.f32 %v287, %v289
        %v292 = vsub.f32 0.0, %v269
        %v293 = vsub.f32 0.0, %v270
        %s294 = scalar_select %p273, 1, 0
        %v295 = vstv %s294
        %vm296 = vcmp.eq.s32.totalorder %v295, 1
        %v297 = vsel %vm296, %v290, %v292
        %v298 = vsel %vm296, %v291, %v293
        %299 = vst [vmem:[%s230] sm:$0xf] %v297
        %300 = vst [vmem:[%s230 + $0x4] sm:$0xf] %v298
        %s301 = sand.u32 %s114, 1
        %s302 = scalar_lea.sflag [#allocation4], %s301
        %s303 = sand.u32 %s114, 1
        %s304 = smul.addr %s303, 8
        %s305 = scalar_lea.vmem [#allocation9], %s304
        // Predicated region
        $region45: #{tpu_custom_call.1} parent=31 // pred_check
          %p306 = pneg %p124
        $region46: #{tpu_custom_call.1} parent=31 // pred_check_branch
          %308 = sbr.rel (%p306) target = $region48
        $region47: #{tpu_custom_call.1} parent=31 // pred_region
          %s310 = ssub.s32 128, 128
          %311 = vsyncadd %s302, %s310
          %s312 = smul.addr %s26, 2
          %s313 = sadd.s32 %s27, %s312
          %s314 = smul.addr %s313, 64
          %s315 = scalar_lea.hbm %s3, %s314
          %s316 = sshll.u32 %s305, 4
          %s317 = int_to_ptr.vmem [resolvable:$true] %s316
          %322 = dma.vmem_to_hbm [thread:$0]  %s317, 128, %s315, %s302, 64, 64, 4
        $region48: #{tpu_custom_call.1} parent=31 // pred_fallthru
          _
      $region32: #{tpu_custom_call.1} parent=5 // pred_fallthru
        _
      %p323 = scmp.le.s32.totalorder 2, %s17
      // Predicated region
      $region49: #{tpu_custom_call.1} parent=5 // pred_check
        %p324 = pneg %p323
      $region50: #{tpu_custom_call.1} parent=5 // pred_check_branch
        %326 = sbr.rel (%p324) target = $region52
      $region51: #{tpu_custom_call.1} parent=5 // pred_region
        %s327 = ssub.s32 %s17, 2
        // Predicated region
        $region53: #{tpu_custom_call.1} parent=51 // pred_check
          %p328 = pneg %p130
        $region54: #{tpu_custom_call.1} parent=51 // pred_check_branch
          %330 = sbr.rel (%p328) target = $region56
        $region55: #{tpu_custom_call.1} parent=51 // pred_region
          %s331 = sand.u32 %s115, 1
          %s332 = scalar_lea.sflag [#allocation4], %s331
          %s333 = sand.u32 %s115, 1
          %s334 = smul.addr %s333, 8
          %s335 = scalar_lea.vmem [#allocation9], %s334
          %336 = dma.done %s332, 128
        $region56: #{tpu_custom_call.1} parent=51 // pred_fallthru
          _
      $region52: #{tpu_custom_call.1} parent=5 // pred_fallthru
        _
    $region6: #{tpu_custom_call.1} parent=1 // loop_footer
      %s21 = sadd.s32 1, %s17
    $region7: #{tpu_custom_call.1} parent=1 // loop_footer_branch
      %16 = sbr.rel target = $region3
    $region8: #{tpu_custom_call.1} parent=1 // loop_exit
      _
    %337 = vsyncpa [#allocation3], 1
    %s338 = scalar_lea.sflag [#allocation3], 1
    %339 = vsyncpa %s338, 1
    %340 = vsyncpa [#allocation4], 1
    %s341 = scalar_lea.sflag [#allocation4], 1
    %342 = vsyncpa %s341, 1
    %343 = vsyncpa [#allocation5], 1
    %s344 = scalar_lea.sflag [#allocation5], 1
    %345 = vsyncpa %s344, 1
    %346 = vsyncpa [#allocation6], 1
    %s347 = scalar_lea.sflag [#allocation6], 1
    %348 = vsyncpa %s347, 1

</llo_original>
